<compile_context>
chip_gen: v7x
topology: tpu7x:2x2x1
jax: 0.10.0
libtpu: 0.0.40
codegen_flags: <defaults>
</compile_context>

<pallas_src>
import functools

import jax
import jax.numpy as jnp
import numpy as np
from jax.experimental import pallas as pl
from jax.experimental.pallas import tpu as pltpu


# ----------------------------------------------------------------------------
# Fully fused kernel: BN1 -> ReLU -> conv1 (1x1) -> BN2 -> ReLU -> conv2 (1x1)
# ----------------------------------------------------------------------------
def _fused_kernel(x_ref, g1_ref, b1_ref, w1_ref, g2_ref, b2_ref, w2_ref, o_ref,
                  *, eps):
    x = x_ref[...]                                   # (B, Cin, HW) f32
    B = x.shape[0]
    inv_m1 = 1.0 / float(x.shape[0] * x.shape[2])    # 1 / (N*H*W)

    # ---- BatchNorm1 (training mode, biased var, two-pass) + ReLU -------------
    mean1 = jnp.sum(x, axis=(0, 2), keepdims=True) * inv_m1          # (1, Cin, 1)
    xc = x - mean1
    var1 = jnp.sum(xc * xc, axis=(0, 2), keepdims=True) * inv_m1     # (1, Cin, 1)
    scale1 = g1_ref[...] * jax.lax.rsqrt(var1 + eps)                 # (1, Cin, 1)
    h1 = jnp.maximum(xc * scale1 + b1_ref[...], 0.0)                 # (B, Cin, HW)

    # ---- 1x1 conv #1: y[b,o,m] = sum_c w1[o,c] * h1[b,c,m] -------------------
    w1 = w1_ref[...]                                                 # (Cout, Cin)
    w1b = jnp.broadcast_to(w1, (B,) + w1.shape)                      # (B, Cout, Cin)
    y = jnp.einsum("boc,bcm->bom", w1b, h1,
                   preferred_element_type=jnp.float32)               # (B, Cout, HW)

    # ---- BatchNorm2 (training mode, biased var, two-pass) + ReLU -------------
    inv_m2 = 1.0 / float(y.shape[0] * y.shape[2])
    mean2 = jnp.sum(y, axis=(0, 2), keepdims=True) * inv_m2          # (1, Cout, 1)
    yc = y - mean2
    var2 = jnp.sum(yc * yc, axis=(0, 2), keepdims=True) * inv_m2
    scale2 = g2_ref[...] * jax.lax.rsqrt(var2 + eps)
    h2 = jnp.maximum(yc * scale2 + b2_ref[...], 0.0)                 # (B, Cout, HW)

    # ---- 1x1 conv #2 ---------------------------------------------------------
    w2 = w2_ref[...]                                                 # (Cout, Cout)
    w2b = jnp.broadcast_to(w2, (B,) + w2.shape)
    o_ref[...] = jnp.einsum("boc,bcm->bom", w2b, h2,
                            preferred_element_type=jnp.float32)      # (B, Cout, HW)


# ----------------------------------------------------------------------------
# Module wrapper
# ----------------------------------------------------------------------------
def sub_sampling_sequence(x_nchw, params, eps=1e-5):
    """Forward pass of subSamplingSequence.

    x_nchw: (B, Cin, H, W) float32
    params: gamma1/beta1 (Cin,), w1 (Cout, Cin), gamma2/beta2 (Cout,), w2 (Cout, Cout)
    returns (B, Cout, H, W) float32
    """
    B, Cin, H, W = x_nchw.shape
    Cout = params["w1"].shape[0]
    HW = H * W

    # Free reshapes only — no XLA transposes, channels stay on the sublane axis,
    # spatial positions land on the (lane-dense) last axis.
    x3d = x_nchw.reshape(B, Cin, HW).astype(jnp.float32)
    g1 = params["gamma1"].reshape(1, Cin, 1).astype(jnp.float32)
    b1 = params["beta1"].reshape(1, Cin, 1).astype(jnp.float32)
    g2 = params["gamma2"].reshape(1, Cout, 1).astype(jnp.float32)
    b2 = params["beta2"].reshape(1, Cout, 1).astype(jnp.float32)
    w1 = params["w1"].astype(jnp.float32)            # (Cout, Cin)
    w2 = params["w2"].astype(jnp.float32)            # (Cout, Cout)

    # Everything must fit in VMEM for the fused single-call path (see TODO above).
    working_bytes = 4 * (B * HW) * (2 * Cin + 4 * Cout)
    assert working_bytes < (8 << 20), "activation slab too large for fused VMEM path"

    vmem_spec = pl.BlockSpec(memory_space=pltpu.MemorySpace.VMEM)
    out3d = pl.pallas_call(
        functools.partial(_fused_kernel, eps=eps),
        out_shape=jax.ShapeDtypeStruct((B, Cout, HW), jnp.float32),
        in_specs=[vmem_spec] * 7,
        out_specs=vmem_spec,
    )(x3d, g1, b1, w1, g2, b2, w2)

    return out3d.reshape(B, Cout, H, W)


# ----------------------------------------------------------------------------
# Pure-JAX reference (mirrors PyTorch training-mode semantics) for validation
# ----------------------------------------------------------------------------
def _reference(x_nchw, params, eps=1e-5):
    def bn(x, gamma, beta):
        mean = jnp.mean(x, axis=(0, 2, 3), keepdims=True)
        var = jnp.var(x, axis=(0, 2, 3), keepdims=True)   # biased variance
        return (x - mean) / jnp.sqrt(var + eps) * gamma.reshape(1, -1, 1, 1) \
               + beta.reshape(1, -1, 1, 1)

    def conv1x1(x, w_oc):  # w_oc: (Cout, Cin_current)
        return jnp.einsum("bchw,oc->bohw", x, w_oc)

    h = jnp.maximum(bn(x_nchw, params["gamma1"], params["beta1"]), 0.0)
    h = conv1x1(h, params["w1"])
    h = jnp.maximum(bn(h, params["gamma2"], params["beta2"]), 0.0)
    h = conv1x1(h, params["w2"])
    return h


if __name__ == "__main__":
    B, Cin, Cout, H, W = 2, 4, 8, 16, 16

    key = jax.random.PRNGKey(0)
    kx, k1, k2, k3, k4, k5, k6 = jax.random.split(key, 7)

    x = jax.random.normal(kx, (B, Cin, H, W), dtype=jnp.float32)

    # Deterministic synthetic parameters (shapes match the PyTorch module;
    # conv weights stored as (Cout, Cin) — the 1x1 kernel dims are squeezed).
    params = {
        "gamma1": 1.0 + 0.1 * jax.random.normal(k1, (Cin,), dtype=jnp.float32),
        "beta1": 0.1 * jax.random.normal(k2, (Cin,), dtype=jnp.float32),
        "w1": jax.random.normal(k3, (Cout, Cin), dtype=jnp.float32) / np.sqrt(Cin),
        "gamma2": 1.0 + 0.1 * jax.random.normal(k4, (Cout,), dtype=jnp.float32),
        "beta2": 0.1 * jax.random.normal(k5, (Cout,), dtype=jnp.float32),
        "w2": jax.random.normal(k6, (Cout, Cout), dtype=jnp.float32) / np.sqrt(Cout),
    }

    out = jax.block_until_ready(sub_sampling_sequence(x, params))
    ref = jax.block_until_ready(_reference(x, params))

    assert out.shape == (B, Cout, H, W), out.shape
    np.testing.assert_allclose(np.asarray(out), np.asarray(ref), rtol=1e-4, atol=1e-4)
    print("KERNEL_OK")
</pallas_src>

<mosaic_0001>
module attributes {stable_mosaic.version = 11 : i64} {
  func.func @_fused_kernel(%arg0: memref<2x4x256xf32, #tpu.memory_space<vmem>>, %arg1: memref<1x4x1xf32, #tpu.memory_space<vmem>>, %arg2: memref<1x4x1xf32, #tpu.memory_space<vmem>>, %arg3: memref<8x4xf32, #tpu.memory_space<vmem>>, %arg4: memref<1x8x1xf32, #tpu.memory_space<vmem>>, %arg5: memref<1x8x1xf32, #tpu.memory_space<vmem>>, %arg6: memref<8x8xf32, #tpu.memory_space<vmem>>, %arg7: memref<2x8x256xf32, #tpu.memory_space<vmem>>) attributes {dimension_semantics = [], scalar_prefetch = 0 : i64, scratch_operands = 0 : i64, tpu.core_type = #tpu.core_type<tc>} {
    %c0 = arith.constant 0 : index
    %c0_0 = arith.constant 0 : index
    %c0_1 = arith.constant 0 : index
    %0 = vector.load %arg0[%c0, %c0_0, %c0_1] : memref<2x4x256xf32, #tpu.memory_space<vmem>>, vector<2x4x256xf32>
    %cst = arith.constant dense<0.000000e+00> : vector<4xf32>
    %1 = vector.multi_reduction <add>, %0, %cst [0, 2] : vector<2x4x256xf32> to vector<4xf32>
    %2 = vector.shape_cast %1 : vector<4xf32> to vector<1x4x1xf32>
    %cst_2 = arith.constant 0.001953125 : f32
    %3 = vector.broadcast %cst_2 : f32 to vector<1x4x1xf32>
    %4 = arith.mulf %2, %3 : vector<1x4x1xf32>
    %5 = vector.broadcast %4 : vector<1x4x1xf32> to vector<2x4x256xf32>
    %6 = arith.subf %0, %5 : vector<2x4x256xf32>
    %7 = arith.mulf %6, %6 : vector<2x4x256xf32>
    %cst_3 = arith.constant dense<0.000000e+00> : vector<4xf32>
    %8 = vector.multi_reduction <add>, %7, %cst_3 [0, 2] : vector<2x4x256xf32> to vector<4xf32>
    %9 = vector.shape_cast %8 : vector<4xf32> to vector<1x4x1xf32>
    %cst_4 = arith.constant 0.001953125 : f32
    %10 = vector.broadcast %cst_4 : f32 to vector<1x4x1xf32>
    %11 = arith.mulf %9, %10 : vector<1x4x1xf32>
    %c0_5 = arith.constant 0 : index
    %c0_6 = arith.constant 0 : index
    %c0_7 = arith.constant 0 : index
    %12 = vector.load %arg1[%c0_5, %c0_6, %c0_7] : memref<1x4x1xf32, #tpu.memory_space<vmem>>, vector<1x4x1xf32>
    %cst_8 = arith.constant 9.99999974E-6 : f32
    %13 = vector.broadcast %cst_8 : f32 to vector<1x4x1xf32>
    %14 = arith.addf %11, %13 : vector<1x4x1xf32>
    %15 = math.rsqrt %14 : vector<1x4x1xf32>
    %16 = arith.mulf %12, %15 : vector<1x4x1xf32>
    %17 = vector.broadcast %16 : vector<1x4x1xf32> to vector<2x4x256xf32>
    %18 = arith.mulf %6, %17 : vector<2x4x256xf32>
    %c0_9 = arith.constant 0 : index
    %c0_10 = arith.constant 0 : index
    %c0_11 = arith.constant 0 : index
    %19 = vector.load %arg2[%c0_9, %c0_10, %c0_11] : memref<1x4x1xf32, #tpu.memory_space<vmem>>, vector<1x4x1xf32>
    %20 = vector.broadcast %19 : vector<1x4x1xf32> to vector<2x4x256xf32>
    %21 = arith.addf %18, %20 : vector<2x4x256xf32>
    %cst_12 = arith.constant 0.000000e+00 : f32
    %22 = vector.broadcast %cst_12 : f32 to vector<2x4x256xf32>
    %23 = arith.maximumf %21, %22 : vector<2x4x256xf32>
    %c0_13 = arith.constant 0 : index
    %c0_14 = arith.constant 0 : index
    %24 = vector.load %arg3[%c0_13, %c0_14] : memref<8x4xf32, #tpu.memory_space<vmem>>, vector<8x4xf32>
    %25 = vector.shape_cast %24 : vector<8x4xf32> to vector<1x8x4xf32>
    %26 = vector.broadcast %25 : vector<1x8x4xf32> to vector<2x8x4xf32>
    "tpu.trace_start"() <{level = 10 : i32, message = "boc,bcm->bom"}> : () -> ()
    %cst_15 = arith.constant dense<0.000000e+00> : vector<2x8x256xf32>
    %27 = tpu.matmul %26, %23, %cst_15 {dimension_numbers = #tpu.dot_dimension_numbers<[2], [1], [1], [2], [0, 0, 0, 1, 1, 2], [0], [0]>} : vector<2x8x4xf32>, vector<2x4x256xf32>, vector<2x8x256xf32> -> vector<2x8x256xf32>
    "tpu.trace_stop"() : () -> ()
    %cst_16 = arith.constant dense<0.000000e+00> : vector<8xf32>
    %28 = vector.multi_reduction <add>, %27, %cst_16 [0, 2] : vector<2x8x256xf32> to vector<8xf32>
    %29 = vector.shape_cast %28 : vector<8xf32> to vector<1x8x1xf32>
    %cst_17 = arith.constant 0.001953125 : f32
    %30 = vector.broadcast %cst_17 : f32 to vector<1x8x1xf32>
    %31 = arith.mulf %29, %30 : vector<1x8x1xf32>
    %32 = vector.broadcast %31 : vector<1x8x1xf32> to vector<2x8x256xf32>
    %33 = arith.subf %27, %32 : vector<2x8x256xf32>
    %34 = arith.mulf %33, %33 : vector<2x8x256xf32>
    %cst_18 = arith.constant dense<0.000000e+00> : vector<8xf32>
    %35 = vector.multi_reduction <add>, %34, %cst_18 [0, 2] : vector<2x8x256xf32> to vector<8xf32>
    %36 = vector.shape_cast %35 : vector<8xf32> to vector<1x8x1xf32>
    %cst_19 = arith.constant 0.001953125 : f32
    %37 = vector.broadcast %cst_19 : f32 to vector<1x8x1xf32>
    %38 = arith.mulf %36, %37 : vector<1x8x1xf32>
    %c0_20 = arith.constant 0 : index
    %c0_21 = arith.constant 0 : index
    %c0_22 = arith.constant 0 : index
    %39 = vector.load %arg4[%c0_20, %c0_21, %c0_22] : memref<1x8x1xf32, #tpu.memory_space<vmem>>, vector<1x8x1xf32>
    %cst_23 = arith.constant 9.99999974E-6 : f32
    %40 = vector.broadcast %cst_23 : f32 to vector<1x8x1xf32>
    %41 = arith.addf %38, %40 : vector<1x8x1xf32>
    %42 = math.rsqrt %41 : vector<1x8x1xf32>
    %43 = arith.mulf %39, %42 : vector<1x8x1xf32>
    %44 = vector.broadcast %43 : vector<1x8x1xf32> to vector<2x8x256xf32>
    %45 = arith.mulf %33, %44 : vector<2x8x256xf32>
    %c0_24 = arith.constant 0 : index
    %c0_25 = arith.constant 0 : index
    %c0_26 = arith.constant 0 : index
    %46 = vector.load %arg5[%c0_24, %c0_25, %c0_26] : memref<1x8x1xf32, #tpu.memory_space<vmem>>, vector<1x8x1xf32>
    %47 = vector.broadcast %46 : vector<1x8x1xf32> to vector<2x8x256xf32>
    %48 = arith.addf %45, %47 : vector<2x8x256xf32>
    %cst_27 = arith.constant 0.000000e+00 : f32
    %49 = vector.broadcast %cst_27 : f32 to vector<2x8x256xf32>
    %50 = arith.maximumf %48, %49 : vector<2x8x256xf32>
    %c0_28 = arith.constant 0 : index
    %c0_29 = arith.constant 0 : index
    %51 = vector.load %arg6[%c0_28, %c0_29] : memref<8x8xf32, #tpu.memory_space<vmem>>, vector<8x8xf32>
    %52 = vector.shape_cast %51 : vector<8x8xf32> to vector<1x8x8xf32>
    %53 = vector.broadcast %52 : vector<1x8x8xf32> to vector<2x8x8xf32>
    "tpu.trace_start"() <{level = 10 : i32, message = "boc,bcm->bom"}> : () -> ()
    %cst_30 = arith.constant dense<0.000000e+00> : vector<2x8x256xf32>
    %54 = tpu.matmul %53, %50, %cst_30 {dimension_numbers = #tpu.dot_dimension_numbers<[2], [1], [1], [2], [0, 0, 0, 1, 1, 2], [0], [0]>} : vector<2x8x8xf32>, vector<2x8x256xf32>, vector<2x8x256xf32> -> vector<2x8x256xf32>
    "tpu.trace_stop"() : () -> ()
    %c0_31 = arith.constant 0 : index
    %c0_32 = arith.constant 0 : index
    %c0_33 = arith.constant 0 : index
    %55 = vector.load %arg7[%c0_31, %c0_32, %c0_33] : memref<2x8x256xf32, #tpu.memory_space<vmem>>, vector<2x8x256xf32>
    tpu.vector_store %arg7[%c0_31, %c0_32, %c0_33], %54 {strides = array<i32>} : memref<2x8x256xf32, #tpu.memory_space<vmem>>, vector<2x8x256xf32>,
    return
  }
}

</mosaic_0001>

<llo_original>
// kernel: tpu_custom_call.1
$region0: #{tpu_custom_call.1}
  #allocation0 [shape = 'u32[]', space=smem, size = 0x4, offset = 0x4, fixed_abs, tag = 'smem constant byte address 0x4 - core index']
  #allocation1 [shape = 'u32[144,128]{1,0:T(1,128)}', space=vmem, size = 0x12000, scoped, tag = 'internal scratch']
  %s0 = inlined_call_operand.vmem [shape: f32[2,4,256], index: 0, kind: input, shape index: {}]
  %s1 = inlined_call_operand.vmem [shape: f32[1,4,1], index: 1, kind: input, shape index: {}]
  %s2 = inlined_call_operand.vmem [shape: f32[1,4,1], index: 2, kind: input, shape index: {}]
  %s3 = inlined_call_operand.vmem [shape: f32[8,4], index: 3, kind: input, shape index: {}]
  %s4 = inlined_call_operand.vmem [shape: f32[1,8,1], index: 4, kind: input, shape index: {}]
  %s5 = inlined_call_operand.vmem [shape: f32[1,8,1], index: 5, kind: input, shape index: {}]
  %s6 = inlined_call_operand.vmem [shape: f32[8,8], index: 6, kind: input, shape index: {}]
  %s7 = inlined_call_operand.hbm [shape: f32[2,8,256], index: 7, kind: output, shape index: {}]
  %s8 = sld [smem:[#allocation0]]
  $region38: #{tpu_custom_call.1} parent=0
    _
  %s10 = ssub.s32 1, %s8
  %s11 = scalar_select 0, %s10, %s8
  $region1: #{tpu_custom_call.1} parent=0
    #allocation2 [shape = 'u8[16384]{0}', space=vmem, size = 0x4000, scoped, tag = 'output window, operand 0, single buffered']
    #allocation3 [shape = 's32[1]{0}', space=sflag, size = 0x4, scoped, tag = 'scoped memory for tpu_custom_call.1']
    %12 = vsyncpa [#allocation3], 0
    // Predicated region
    $region2: #{tpu_custom_call.1} parent=1 // pred_check
      _
    $region3: #{tpu_custom_call.1} parent=1 // pred_check_branch
      %14 = sbr.rel (0) target = $region5
    $region4: #{tpu_custom_call.1} parent=1 // pred_region
      _
    $region5: #{tpu_custom_call.1} parent=1 // pred_fallthru
      _
    // Predicated region
    $region6: #{tpu_custom_call.1} parent=1 // pred_check
      _
    $region7: #{tpu_custom_call.1} parent=1 // pred_check_branch
      %16 = sbr.rel (0) target = $region9
    $region8: #{tpu_custom_call.1} parent=1 // pred_region
      _
    $region9: #{tpu_custom_call.1} parent=1 // pred_fallthru
      _
    // Predicated region
    $region10: #{tpu_custom_call.1} parent=1 // pred_check
      _
    $region11: #{tpu_custom_call.1} parent=1 // pred_check_branch
      %18 = sbr.rel (0) target = $region13
    $region12: #{tpu_custom_call.1} parent=1 // pred_region
      _
    $region13: #{tpu_custom_call.1} parent=1 // pred_fallthru
      _
    // Predicated region
    $region14: #{tpu_custom_call.1} parent=1 // pred_check
      _
    $region15: #{tpu_custom_call.1} parent=1 // pred_check_branch
      %20 = sbr.rel (0) target = $region17
    $region16: #{tpu_custom_call.1} parent=1 // pred_region
      _
    $region17: #{tpu_custom_call.1} parent=1 // pred_fallthru
      _
    // Predicated region
    $region18: #{tpu_custom_call.1} parent=1 // pred_check
      _
    $region19: #{tpu_custom_call.1} parent=1 // pred_check_branch
      %22 = sbr.rel (0) target = $region21
    $region20: #{tpu_custom_call.1} parent=1 // pred_region
      _
    $region21: #{tpu_custom_call.1} parent=1 // pred_fallthru
      _
    // Predicated region
    $region22: #{tpu_custom_call.1} parent=1 // pred_check
      _
    $region23: #{tpu_custom_call.1} parent=1 // pred_check_branch
      %24 = sbr.rel (0) target = $region25
    $region24: #{tpu_custom_call.1} parent=1 // pred_region
      _
    $region25: #{tpu_custom_call.1} parent=1 // pred_fallthru
      _
    // Predicated region
    $region26: #{tpu_custom_call.1} parent=1 // pred_check
      _
    $region27: #{tpu_custom_call.1} parent=1 // pred_check_branch
      %26 = sbr.rel (0) target = $region29
    $region28: #{tpu_custom_call.1} parent=1 // pred_region
      _
    $region29: #{tpu_custom_call.1} parent=1 // pred_fallthru
      _
    %v27 = vld [vmem:[%s0] sm:$0xff]
    %v28 = vld [vmem:[%s0 + $0x8] sm:$0xff]
    %v31 = vcombine.high %v27, %v27
    %v32 = vcombine.high %v28, %v28
    %vm35 = vcmask 1043456
    %v36 = vsel %vm35, %v27, 0.0
    %v37 = vsel %vm35, %v31, 0.0
    %v38 = vadd.f32 %v36, %v37
    %v39 = vsel %vm35, %v28, 0.0
    %v40 = vadd.f32 %v38, %v39
    %v41 = vsel %vm35, %v32, 0.0
    %v42 = vadd.f32 %v40, %v41
    %43 = vadd.xlane.f32.xlu0 %v42
    %v44 = vpop.xlane.xlu0 %43
    %v45 = vmul.f32 %v44, 0.001953125
    %v48 = vunpack.c.l.s4 839922192
    %v49 = vunpack.c.0.s8 %v48
    %v50 = vlaneseq
    %v51 = vshrl.u32 %v50, 7
    %v52 = vsub.s32 %v49, %v51
    %v53 = vrot.slane %v45, %v52
    %v55 = vsub.f32 %v27, %v53
    %v56 = vsub.f32 %v28, %v53
    %v57 = vmul.f32 %v55, %v55
    %v58 = vmul.f32 %v56, %v56
    %v61 = vcombine.high %v57, %v57
    %v62 = vcombine.high %v58, %v58
    %v65 = vsel %vm35, %v57, 0.0
    %v66 = vsel %vm35, %v61, 0.0
    %v67 = vadd.f32 %v65, %v66
    %v68 = vsel %vm35, %v58, 0.0
    %v69 = vadd.f32 %v67, %v68
    %v70 = vsel %vm35, %v62, 0.0
    %v71 = vadd.f32 %v69, %v70
    %72 = vadd.xlane.f32.xlu0 %v71
    %v73 = vpop.xlane.xlu0 %72
    %v74 = vmul.f32 %v73, 0.001953125
    %v75 = vld [vmem:[%s1] sm:$0xf]
    %v76 = vadd.f32 %v74, 1e-05
    %v77 = vrsqrt.pop %v76
    %v78 = vmul.f32 %v75, %v77
    %80 = vset.pattern.permute.xlu0 0
    %81 = vperm.xlu0 %80, %v78
    %v82 = vpop.permute.xlu0 %81
    %v84 = vunpack.c.l.s4 839922192
    %v85 = vunpack.c.0.s8 %v84
    %v86 = vlaneseq
    %v87 = vshrl.u32 %v86, 7
    %v88 = vsub.s32 %v85, %v87
    %v89 = vrot.slane %v82, %v88
    %v91 = vmul.f32 %v55, %v89
    %v92 = vmul.f32 %v56, %v89
    %v93 = vld [vmem:[%s2] sm:$0xf]
    %95 = vset.pattern.permute.xlu0 0
    %96 = vperm.xlu0 %95, %v93
    %v97 = vpop.permute.xlu0 %96
    %v99 = vunpack.c.l.s4 839922192
    %v100 = vunpack.c.0.s8 %v99
    %v101 = vlaneseq
    %v102 = vshrl.u32 %v101, 7
    %v103 = vsub.s32 %v100, %v102
    %v104 = vrot.slane %v97, %v103
    %v106 = vadd.f32 %v91, %v104
    %v107 = vadd.f32 %v92, %v104
    %v108 = vmax.f32 %v106, 0.0
    %v109 = vmax.f32 %v107, 0.0
    %v110 = vld [vmem:[%s3] sm:$0xff]
    %v112 = vcombine.high %v108, %v108
    %vm113 = vcmask 31744
    %v115 = vsel %vm113, %v110, 0
    %v117 = vsel %vm35, %v108, 0
    %v119 = vsel %vm35, %v112, 0
    %121 = vmatprep.subr.mxu0 %v119
    %122 = vmatpush1.msra.mxu0 %v117
    %123 = vmatprep.subr.mxu0 0.0
    %124 = vmatpush1.msra.mxu0 0.0
    %125 = vmatprep.subr.mxu0 0.0
    %126 = vmatpush1.msra.mxu0 0.0
    %127 = vmatprep.subr.mxu0 0.0
    %128 = vmatpush1.msra.mxu0 0.0
    %129 = vmatprep.subr.mxu0 0.0
    %130 = vmatpush1.msra.mxu0 0.0
    %131 = vmatprep.subr.mxu0 0.0
    %132 = vmatpush1.msra.mxu0 0.0
    %133 = vmatprep.subr.mxu0 0.0
    %134 = vmatpush1.msra.mxu0 0.0
    %135 = vmatprep.subr.mxu0 0.0
    %136 = vmatpush1.msra.mxu0 0.0
    %137 = vmatprep.subr.mxu0 0.0
    %138 = vmatpush1.msra.mxu0 0.0
    %139 = vmatprep.subr.mxu0 0.0
    %140 = vmatpush1.msra.mxu0 0.0
    %141 = vmatprep.subr.mxu0 0.0
    %142 = vmatpush1.msra.mxu0 0.0
    %143 = vmatprep.subr.mxu0 0.0
    %144 = vmatpush1.msra.mxu0 0.0
    %145 = vmatprep.subr.mxu0 0.0
    %146 = vmatpush1.msra.mxu0 0.0
    %147 = vmatprep.subr.mxu0 0.0
    %148 = vmatpush1.msra.mxu0 0.0
    %149 = vmatprep.subr.mxu0 0.0
    %150 = vmatpush1.msra.mxu0 0.0
    %151 = vmatprep.subr.mxu0 0.0
    %152 = vmatpush1.msra.mxu0 0.0
    %153 = vmatprep.subr.mxu0 0.0
    %154 = vmatpush1.msra.mxu0 0.0
    %155 = vmatprep.subr.mxu0 0.0
    %156 = vmatpush1.msra.mxu0 0.0
    %157 = vmatprep.subr.mxu0 0.0
    %158 = vmatpush1.msra.mxu0 0.0
    %159 = vmatprep.subr.mxu0 0.0
    %160 = vmatpush1.msra.mxu0 0.0
    %161 = vmatprep.subr.mxu0 0.0
    %162 = vmatpush1.msra.mxu0 0.0
    %163 = vmatprep.subr.mxu0 0.0
    %164 = vmatpush1.msra.mxu0 0.0
    %165 = vmatprep.subr.mxu0 0.0
    %166 = vmatpush1.msra.mxu0 0.0
    %167 = vmatprep.subr.mxu0 0.0
    %168 = vmatpush1.msra.mxu0 0.0
    %169 = vmatprep.subr.mxu0 0.0
    %170 = vmatpush1.msra.mxu0 0.0
    %171 = vmatprep.subr.mxu0 0.0
    %172 = vmatpush1.msra.mxu0 0.0
    %173 = vmatprep.subr.mxu0 0.0
    %174 = vmatpush1.msra.mxu0 0.0
    %175 = vmatprep.subr.mxu0 0.0
    %176 = vmatpush1.msra.mxu0 0.0
    %177 = vmatprep.subr.mxu0 0.0
    %178 = vmatpush1.msra.mxu0 0.0
    %179 = vmatprep.subr.mxu0 0.0
    %180 = vmatpush1.msra.mxu0 0.0
    %181 = vmatprep.subr.mxu0 0.0
    %182 = vmatpush1.msra.mxu0 0.0
    %183 = vmatprep.subr.mxu0 0.0
    %184 = vmatpush1.msra.mxu0 0.0
    %185 = vmatprep.mubr.f32.mxu0 0.0
    %186 = vmatmul.mubr.f32.gmra.mrb[0].mxu0 %v115
    %v187 = vpop.f32.mrb[0].mxu0
    %v188 = vadd.f32 0.0, %v187
    %v189 = vpop.f32.mrb[0].mxu0
    %v190 = vadd.f32 0.0, %v189
    %191 = vdwg.mxu0
    %v193 = vcombine.high %v109, %v109
    %v194 = vsel %vm35, %v109, 0
    %v196 = vsel %vm35, %v193, 0
    %198 = vmatprep.subr.mxu0 %v196
    %199 = vmatpush1.msra.mxu0 %v194
    %200 = vmatprep.subr.mxu0 0.0
    %201 = vmatpush1.msra.mxu0 0.0
    %202 = vmatprep.subr.mxu0 0.0
    %203 = vmatpush1.msra.mxu0 0.0
    %204 = vmatprep.subr.mxu0 0.0
    %205 = vmatpush1.msra.mxu0 0.0
    %206 = vmatprep.subr.mxu0 0.0
    %207 = vmatpush1.msra.mxu0 0.0
    %208 = vmatprep.subr.mxu0 0.0
    %209 = vmatpush1.msra.mxu0 0.0
    %210 = vmatprep.subr.mxu0 0.0
    %211 = vmatpush1.msra.mxu0 0.0
    %212 = vmatprep.subr.mxu0 0.0
    %213 = vmatpush1.msra.mxu0 0.0
    %214 = vmatprep.subr.mxu0 0.0
    %215 = vmatpush1.msra.mxu0 0.0
    %216 = vmatprep.subr.mxu0 0.0
    %217 = vmatpush1.msra.mxu0 0.0
    %218 = vmatprep.subr.mxu0 0.0
    %219 = vmatpush1.msra.mxu0 0.0
    %220 = vmatprep.subr.mxu0 0.0
    %221 = vmatpush1.msra.mxu0 0.0
    %222 = vmatprep.subr.mxu0 0.0
    %223 = vmatpush1.msra.mxu0 0.0
    %224 = vmatprep.subr.mxu0 0.0
    %225 = vmatpush1.msra.mxu0 0.0
    %226 = vmatprep.subr.mxu0 0.0
    %227 = vmatpush1.msra.mxu0 0.0
    %228 = vmatprep.subr.mxu0 0.0
    %229 = vmatpush1.msra.mxu0 0.0
    %230 = vmatprep.subr.mxu0 0.0
    %231 = vmatpush1.msra.mxu0 0.0
    %232 = vmatprep.subr.mxu0 0.0
    %233 = vmatpush1.msra.mxu0 0.0
    %234 = vmatprep.subr.mxu0 0.0
    %235 = vmatpush1.msra.mxu0 0.0
    %236 = vmatprep.subr.mxu0 0.0
    %237 = vmatpush1.msra.mxu0 0.0
    %238 = vmatprep.subr.mxu0 0.0
    %239 = vmatpush1.msra.mxu0 0.0
    %240 = vmatprep.subr.mxu0 0.0
    %241 = vmatpush1.msra.mxu0 0.0
    %242 = vmatprep.subr.mxu0 0.0
    %243 = vmatpush1.msra.mxu0 0.0
    %244 = vmatprep.subr.mxu0 0.0
    %245 = vmatpush1.msra.mxu0 0.0
    %246 = vmatprep.subr.mxu0 0.0
    %247 = vmatpush1.msra.mxu0 0.0
    %248 = vmatprep.subr.mxu0 0.0
    %249 = vmatpush1.msra.mxu0 0.0
    %250 = vmatprep.subr.mxu0 0.0
    %251 = vmatpush1.msra.mxu0 0.0
    %252 = vmatprep.subr.mxu0 0.0
    %253 = vmatpush1.msra.mxu0 0.0
    %254 = vmatprep.subr.mxu0 0.0
    %255 = vmatpush1.msra.mxu0 0.0
    %256 = vmatprep.subr.mxu0 0.0
    %257 = vmatpush1.msra.mxu0 0.0
    %258 = vmatprep.subr.mxu0 0.0
    %259 = vmatpush1.msra.mxu0 0.0
    %260 = vmatprep.subr.mxu0 0.0
    %261 = vmatpush1.msra.mxu0 0.0
    %262 = vmatprep.mubr.f32.mxu0 0.0
    %263 = vmatmul.mubr.f32.gmra.mrb[0].mxu0 %v115
    %v264 = vpop.f32.mrb[0].mxu0
    %v265 = vadd.f32 0.0, %v264
    %v266 = vpop.f32.mrb[0].mxu0
    %v267 = vadd.f32 0.0, %v266
    %268 = vdwg.mxu0
    %v269 = vadd.f32 %v188, %v190
    %v270 = vadd.f32 %v269, %v265
    %v271 = vadd.f32 %v270, %v267
    %272 = vadd.xlane.f32.xlu0 %v271
    %v273 = vpop.xlane.xlu0 %272
    %v274 = vmul.f32 %v273, 0.001953125
    %v275 = vsub.f32 %v188, %v274
    %v276 = vsub.f32 %v190, %v274
    %v277 = vsub.f32 %v265, %v274
    %v278 = vsub.f32 %v267, %v274
    %v279 = vmul.f32 %v275, %v275
    %v280 = vmul.f32 %v276, %v276
    %v281 = vmul.f32 %v277, %v277
    %v282 = vmul.f32 %v278, %v278
    %v283 = vadd.f32 %v279, %v280
    %v284 = vadd.f32 %v283, %v281
    %v285 = vadd.f32 %v284, %v282
    %286 = vadd.xlane.f32.xlu0 %v285
    %v287 = vpop.xlane.xlu0 %286
    %v288 = vmul.f32 %v287, 0.001953125
    %v289 = vld [vmem:[%s4] sm:$0xff]
    %v290 = vadd.f32 %v288, 1e-05
    %v291 = vrsqrt.pop %v290
    %v292 = vmul.f32 %v289, %v291
    %294 = vset.pattern.permute.xlu0 0
    %295 = vperm.xlu0 %294, %v292
    %v296 = vpop.permute.xlu0 %295
    %v298 = vmul.f32 %v275, %v296
    %v299 = vmul.f32 %v276, %v296
    %v300 = vmul.f32 %v277, %v296
    %v301 = vmul.f32 %v278, %v296
    %v302 = vld [vmem:[%s5] sm:$0xff]
    %304 = vset.pattern.permute.xlu0 0
    %305 = vperm.xlu0 %304, %v302
    %v306 = vpop.permute.xlu0 %305
    %v308 = vadd.f32 %v298, %v306
    %v309 = vadd.f32 %v299, %v306
    %v310 = vadd.f32 %v300, %v306
    %v311 = vadd.f32 %v301, %v306
    %v312 = vmax.f32 %v308, 0.0
    %v313 = vmax.f32 %v309, 0.0
    %v314 = vmax.f32 %v310, 0.0
    %v315 = vmax.f32 %v311, 0.0
    %v316 = vld [vmem:[%s6] sm:$0xff]
    %vm317 = vcmask 64512
    %v319 = vsel %vm317, %v316, 0
    %321 = vmatprep.subr.mxu0 %v313
    %322 = vmatpush1.msra.mxu0 %v312
    %323 = vmatprep.subr.mxu0 0.0
    %324 = vmatpush1.msra.mxu0 0.0
    %325 = vmatprep.subr.mxu0 0.0
    %326 = vmatpush1.msra.mxu0 0.0
    %327 = vmatprep.subr.mxu0 0.0
    %328 = vmatpush1.msra.mxu0 0.0
    %329 = vmatprep.subr.mxu0 0.0
    %330 = vmatpush1.msra.mxu0 0.0
    %331 = vmatprep.subr.mxu0 0.0
    %332 = vmatpush1.msra.mxu0 0.0
    %333 = vmatprep.subr.mxu0 0.0
    %334 = vmatpush1.msra.mxu0 0.0
    %335 = vmatprep.subr.mxu0 0.0
    %336 = vmatpush1.msra.mxu0 0.0
    %337 = vmatprep.subr.mxu0 0.0
    %338 = vmatpush1.msra.mxu0 0.0
    %339 = vmatprep.subr.mxu0 0.0
    %340 = vmatpush1.msra.mxu0 0.0
    %341 = vmatprep.subr.mxu0 0.0
    %342 = vmatpush1.msra.mxu0 0.0
    %343 = vmatprep.subr.mxu0 0.0
    %344 = vmatpush1.msra.mxu0 0.0
    %345 = vmatprep.subr.mxu0 0.0
    %346 = vmatpush1.msra.mxu0 0.0
    %347 = vmatprep.subr.mxu0 0.0
    %348 = vmatpush1.msra.mxu0 0.0
    %349 = vmatprep.subr.mxu0 0.0
    %350 = vmatpush1.msra.mxu0 0.0
    %351 = vmatprep.subr.mxu0 0.0
    %352 = vmatpush1.msra.mxu0 0.0
    %353 = vmatprep.subr.mxu0 0.0
    %354 = vmatpush1.msra.mxu0 0.0
    %355 = vmatprep.subr.mxu0 0.0
    %356 = vmatpush1.msra.mxu0 0.0
    %357 = vmatprep.subr.mxu0 0.0
    %358 = vmatpush1.msra.mxu0 0.0
    %359 = vmatprep.subr.mxu0 0.0
    %360 = vmatpush1.msra.mxu0 0.0
    %361 = vmatprep.subr.mxu0 0.0
    %362 = vmatpush1.msra.mxu0 0.0
    %363 = vmatprep.subr.mxu0 0.0
    %364 = vmatpush1.msra.mxu0 0.0
    %365 = vmatprep.subr.mxu0 0.0
    %366 = vmatpush1.msra.mxu0 0.0
    %367 = vmatprep.subr.mxu0 0.0
    %368 = vmatpush1.msra.mxu0 0.0
    %369 = vmatprep.subr.mxu0 0.0
    %370 = vmatpush1.msra.mxu0 0.0
    %371 = vmatprep.subr.mxu0 0.0
    %372 = vmatpush1.msra.mxu0 0.0
    %373 = vmatprep.subr.mxu0 0.0
    %374 = vmatpush1.msra.mxu0 0.0
    %375 = vmatprep.subr.mxu0 0.0
    %376 = vmatpush1.msra.mxu0 0.0
    %377 = vmatprep.subr.mxu0 0.0
    %378 = vmatpush1.msra.mxu0 0.0
    %379 = vmatprep.subr.mxu0 0.0
    %380 = vmatpush1.msra.mxu0 0.0
    %381 = vmatprep.subr.mxu0 0.0
    %382 = vmatpush1.msra.mxu0 0.0
    %383 = vmatprep.subr.mxu0 0.0
    %384 = vmatpush1.msra.mxu0 0.0
    %385 = vmatprep.mubr.f32.mxu0 0.0
    %386 = vmatmul.mubr.f32.gmra.mrb[0].mxu0 %v319
    %v387 = vpop.f32.mrb[0].mxu0
    %v388 = vadd.f32 0.0, %v387
    %v389 = vpop.f32.mrb[0].mxu0
    %v390 = vadd.f32 0.0, %v389
    %391 = vdwg.mxu0
    %392 = vmatprep.subr.mxu0 %v315
    %393 = vmatpush1.msra.mxu0 %v314
    %394 = vmatprep.subr.mxu0 0.0
    %395 = vmatpush1.msra.mxu0 0.0
    %396 = vmatprep.subr.mxu0 0.0
    %397 = vmatpush1.msra.mxu0 0.0
    %398 = vmatprep.subr.mxu0 0.0
    %399 = vmatpush1.msra.mxu0 0.0
    %400 = vmatprep.subr.mxu0 0.0
    %401 = vmatpush1.msra.mxu0 0.0
    %402 = vmatprep.subr.mxu0 0.0
    %403 = vmatpush1.msra.mxu0 0.0
    %404 = vmatprep.subr.mxu0 0.0
    %405 = vmatpush1.msra.mxu0 0.0
    %406 = vmatprep.subr.mxu0 0.0
    %407 = vmatpush1.msra.mxu0 0.0
    %408 = vmatprep.subr.mxu0 0.0
    %409 = vmatpush1.msra.mxu0 0.0
    %410 = vmatprep.subr.mxu0 0.0
    %411 = vmatpush1.msra.mxu0 0.0
    %412 = vmatprep.subr.mxu0 0.0
    %413 = vmatpush1.msra.mxu0 0.0
    %414 = vmatprep.subr.mxu0 0.0
    %415 = vmatpush1.msra.mxu0 0.0
    %416 = vmatprep.subr.mxu0 0.0
    %417 = vmatpush1.msra.mxu0 0.0
    %418 = vmatprep.subr.mxu0 0.0
    %419 = vmatpush1.msra.mxu0 0.0
    %420 = vmatprep.subr.mxu0 0.0
    %421 = vmatpush1.msra.mxu0 0.0
    %422 = vmatprep.subr.mxu0 0.0
    %423 = vmatpush1.msra.mxu0 0.0
    %424 = vmatprep.subr.mxu0 0.0
    %425 = vmatpush1.msra.mxu0 0.0
    %426 = vmatprep.subr.mxu0 0.0
    %427 = vmatpush1.msra.mxu0 0.0
    %428 = vmatprep.subr.mxu0 0.0
    %429 = vmatpush1.msra.mxu0 0.0
    %430 = vmatprep.subr.mxu0 0.0
    %431 = vmatpush1.msra.mxu0 0.0
    %432 = vmatprep.subr.mxu0 0.0
    %433 = vmatpush1.msra.mxu0 0.0
    %434 = vmatprep.subr.mxu0 0.0
    %435 = vmatpush1.msra.mxu0 0.0
    %436 = vmatprep.subr.mxu0 0.0
    %437 = vmatpush1.msra.mxu0 0.0
    %438 = vmatprep.subr.mxu0 0.0
    %439 = vmatpush1.msra.mxu0 0.0
    %440 = vmatprep.subr.mxu0 0.0
    %441 = vmatpush1.msra.mxu0 0.0
    %442 = vmatprep.subr.mxu0 0.0
    %443 = vmatpush1.msra.mxu0 0.0
    %444 = vmatprep.subr.mxu0 0.0
    %445 = vmatpush1.msra.mxu0 0.0
    %446 = vmatprep.subr.mxu0 0.0
    %447 = vmatpush1.msra.mxu0 0.0
    %448 = vmatprep.subr.mxu0 0.0
    %449 = vmatpush1.msra.mxu0 0.0
    %450 = vmatprep.subr.mxu0 0.0
    %451 = vmatpush1.msra.mxu0 0.0
    %452 = vmatprep.subr.mxu0 0.0
    %453 = vmatpush1.msra.mxu0 0.0
    %454 = vmatprep.subr.mxu0 0.0
    %455 = vmatpush1.msra.mxu0 0.0
    %456 = vmatprep.mubr.f32.mxu0 0.0
    %457 = vmatmul.mubr.f32.gmra.mrb[0].mxu0 %v319
    %v458 = vpop.f32.mrb[0].mxu0
    %v459 = vadd.f32 0.0, %v458
    %v460 = vpop.f32.mrb[0].mxu0
    %v461 = vadd.f32 0.0, %v460
    %462 = vdwg.mxu0
    %463 = vst [vmem:[#allocation2] sm:$0xff] %v388
    %464 = vst [vmem:[#allocation2 + $0x8] sm:$0xff] %v390
    %465 = vst [vmem:[#allocation2 + $0x10] sm:$0xff] %v459
    %466 = vst [vmem:[#allocation2 + $0x18] sm:$0xff] %v461
    // Predicated region
    $region30: #{tpu_custom_call.1} parent=1 // pred_check
      _
    $region31: #{tpu_custom_call.1} parent=1 // pred_check_branch
      %468 = sbr.rel (0) target = $region33
    $region32: #{tpu_custom_call.1} parent=1 // pred_region
      %s470 = ssub.s32 512, 512
      %471 = vsyncadd [#allocation3], %s470
      %s472 = sshll.u32 [#allocation2], 4
      %s473 = int_to_ptr.vmem [resolvable:$true] %s472
      %478 = dma.vmem_to_hbm [thread:$0]  %s473, 512, %s7, [#allocation3], 256, 256, 16
    $region33: #{tpu_custom_call.1} parent=1 // pred_fallthru
      _
    // Predicated region
    $region34: #{tpu_custom_call.1} parent=1 // pred_check
      _
    $region35: #{tpu_custom_call.1} parent=1 // pred_check_branch
      %480 = sbr.rel (0) target = $region37
    $region36: #{tpu_custom_call.1} parent=1 // pred_region
      %481 = dma.done [#allocation3], 512
    $region37: #{tpu_custom_call.1} parent=1 // pred_fallthru
      _
    %482 = vsyncpa [#allocation3], 1

</llo_original>
